<compile_context>
chip_gen: v7x
topology: tpu7x:2x2x1
jax: 0.10.0
libtpu: 0.0.40
codegen_flags: <defaults>
</compile_context>

<pallas_src>
from abc import ABCMeta, abstractmethod

import jax
import jax.numpy as jnp
from jax.experimental import pallas as pl
from jax.experimental.pallas import tpu as pltpu

LANES = 128
SUBLANES = 8
MAX_BLOCK_ROWS = 2048   # rows of 128 lanes per grid step (1 MiB f32 per buffer)
NUM_SPLITS = 2          # leading "parallel" grid axis (both TCs on v7x)


def _cdiv(a: int, b: int) -> int:
    return -(-a // b)


def _round_up(a: int, b: int) -> int:
    return _cdiv(a, b) * b


# ---------------------------------------------------------------------------
# Pallas kernel: per-split partial sums of a (rows, 128) slab.
#   grid = (splits, blocks_per_split); axis 1 is the reduction axis.
#   acc_ref is an (8, 128) VMEM accumulator (1024 parallel partial sums);
#   the per-step work is VPU-only adds, the XLU reduce happens outside.
# ---------------------------------------------------------------------------
def _sum_kernel(x_ref, o_ref, acc_ref):
    @pl.when(pl.program_id(1) == 0)
    def _():
        acc_ref[...] = jnp.zeros_like(acc_ref)

    # In-kernel upcast (native param dtype streamed from HBM).
    x = x_ref[...].astype(jnp.float32)                    # (block_rows, 128)
    # (block_rows, 128) -> (block_rows//8, 8, 128): tile-preserving reshape; the
    # axis-0 sum is a chain of elementwise vreg adds (VPU), no cross-lane work.
    acc_ref[...] += x.reshape(-1, SUBLANES, LANES).sum(axis=0)

    @pl.when(pl.program_id(1) == pl.num_programs(1) - 1)
    def _():
        o_ref[...] = acc_ref[...]


def _choose_blocking(n: int):
    """Pick (block_rows, splits, blocks_per_split, total_rows) for n elements."""
    rows0 = max(_cdiv(n, LANES), 1)
    rows8 = _round_up(rows0, SUBLANES)
    if rows8 <= MAX_BLOCK_ROWS:
        n_blocks = 1
        block_rows = rows8
    else:
        # Even out blocks so padding stays small instead of up to a full block.
        n_blocks = _cdiv(rows8, MAX_BLOCK_ROWS)
        block_rows = _round_up(_cdiv(rows8, n_blocks), SUBLANES)
    splits = NUM_SPLITS if n_blocks >= NUM_SPLITS else 1
    blocks_per_split = _cdiv(n_blocks, splits)
    total_rows = blocks_per_split * splits * block_rows
    return block_rows, splits, blocks_per_split, total_rows


def _pallas_param_sum(p: jax.Array) -> jax.Array:
    """Global sum of all elements of `p` (any shape / dtype) as an f32 scalar."""
    flat = p.reshape(-1)                 # keep native dtype; cast in-kernel
    n = flat.shape[0]

    block_rows, splits, blocks_per_split, total_rows = _choose_blocking(n)

    pad = total_rows * LANES - n
    if pad:
        # Single pad op (no concat); zero padding does not change the sum.
        flat = jnp.pad(flat, (0, pad))
    x2d = flat.reshape(total_rows, LANES)

    out = pl.pallas_call(
        _sum_kernel,
        out_shape=jax.ShapeDtypeStruct((splits * SUBLANES, LANES), jnp.float32),
        grid_spec=pltpu.PrefetchScalarGridSpec(
            num_scalar_prefetch=0,
            grid=(splits, blocks_per_split),
            in_specs=[pl.BlockSpec(
                (block_rows, LANES),
                lambda s, i, _bps=blocks_per_split: (s * _bps + i, 0))],
            out_specs=pl.BlockSpec((SUBLANES, LANES), lambda s, i: (s, 0)),
            scratch_shapes=[pltpu.VMEM((SUBLANES, LANES), jnp.float32)],
        ),
        compiler_params=pltpu.CompilerParams(
            # axis 0: independent splits (megacore on v7x); axis 1: reduction.
            dimension_semantics=("parallel", "arbitrary"),
            # Well above what the 1 MiB double-buffered tiles need; explicit so
            # v5e's 16 MiB default scoped limit is never the constraint.
            vmem_limit_bytes=32 * 1024 * 1024,
        ),
    )(x2d)

    # Tiny finalize: reduce the (splits*8, 128) partial-sum slab.
    return jnp.sum(out)


# ---------------------------------------------------------------------------
# JAX port of BaseModule
# ---------------------------------------------------------------------------
class BaseModuleJax(metaclass=ABCMeta):
    def __init__(self):
        self.is_loaded = False
        self._params: dict[str, jax.Array] = {}

    def parameters(self):
        return list(self._params.values())

    @abstractmethod
    def forward(self, *args, **kwargs):
        raise NotImplementedError

    @abstractmethod
    def load(self, *args, **kwargs) -> None:
        raise NotImplementedError

    @property
    def dtype(self):
        _dtype = None
        for p in self.parameters():
            if _dtype is None:
                _dtype = p.dtype
            else:
                assert _dtype == p.dtype
        assert _dtype is not None
        return _dtype

    @property
    def device(self):
        _device = None
        for p in self.parameters():
            d = list(p.devices())[0]
            if _device is None:
                _device = d
            else:
                assert _device == d
        assert _device is not None
        return _device

    def param_mean(self):
        # Equivalent of: sum_p mean(p)*numel(p) / sum_p numel(p)
        # Per-parameter Pallas reduction (no global concat / wrapper cast);
        # the tiny cross-parameter combine happens in JAX.
        partial_sums = [_pallas_param_sum(p) for p in self.parameters()]
        param_num = int(sum(int(p.size) for p in self.parameters()))
        param_sum = jax.block_until_ready(
            jnp.sum(jnp.stack(partial_sums)) if partial_sums else jnp.float32(0.0))
        return (f"{float(param_sum) / param_num:.8e}", param_num)


class ConcreteModule(BaseModuleJax):
    """Minimal concrete subclass with deterministic synthetic parameters."""

    def __init__(self, key):
        super().__init__()
        k1, k2, k3, k4 = jax.random.split(key, 4)
        # Vision-style parameters: linear weight+bias, conv weight (OIHW) and a
        # positional embedding large enough to exercise the multi-block /
        # two-split grid path.
        self._params = {
            "proj.weight": jax.random.normal(k1, (32, 64), jnp.float32) * 0.02,
            "proj.bias": jax.random.normal(k2, (64,), jnp.float32) * 0.02,
            "conv.weight": jax.random.normal(k3, (4, 4, 3, 3), jnp.float32) * 0.02,
            "pos_embed": jax.random.normal(k4, (257, 1024), jnp.float32) * 0.02,
        }

    def forward(self, *args, **kwargs):
        # Abstract in the reference module; nothing concrete to translate.
        raise NotImplementedError

    def load(self, *args, **kwargs) -> None:
        self.is_loaded = True


if __name__ == "__main__":
    key = jax.random.PRNGKey(0)
    module = ConcreteModule(key)
    module.load()

    mean_str, param_num = module.param_mean()

    # Reference check in plain JAX (mirrors the torch formula exactly).
    ref_sum = 0.0
    ref_num = 0
    for p in module.parameters():
        ref_sum += float(jnp.mean(p)) * p.size
        ref_num += p.size
    ref_mean = ref_sum / ref_num

    assert param_num == ref_num, (param_num, ref_num)
    assert abs(float(mean_str) - ref_mean) <= 1e-6 * max(1.0, abs(ref_mean)) + 1e-9, (
        mean_str,
        ref_mean,
    )

    print("KERNEL_OK")
</pallas_src>

<mosaic_0001>
module attributes {stable_mosaic.version = 11 : i64} {
  func.func @_sum_kernel(%arg0: i32, %arg1: i32, %arg2: memref<16x128xf32, #tpu.memory_space<vmem>>, %arg3: memref<8x128xf32, #tpu.memory_space<vmem>>, %arg4: memref<8x128xf32, #tpu.memory_space<vmem>>) attributes {dimension_semantics = [#tpu.dimension_semantics<parallel>, #tpu.dimension_semantics<arbitrary>], iteration_bounds = array<i64: 1, 1>, scalar_prefetch = 0 : i64, scratch_operands = 1 : i64, tpu.core_type = #tpu.core_type<tc>, window_params = [{transform_indices = @transform_0, window_bounds = array<i64: 16, 128>}, {transform_indices = @transform_1, window_bounds = array<i64: 8, 128>}]} {
    %c0_i32 = arith.constant 0 : i32
    %0 = arith.cmpi eq, %arg1, %c0_i32 : i32
    %1 = arith.extui %0 : i1 to i32
    %c0_i32_0 = arith.constant 0 : i32
    %2 = arith.cmpi ne, %1, %c0_i32_0 : i32
    scf.if %2 {
      %cst_8 = arith.constant 0.000000e+00 : f32
      %12 = vector.broadcast %cst_8 : f32 to vector<8x128xf32>
      %c0_9 = arith.constant 0 : index
      %c0_10 = arith.constant 0 : index
      %13 = vector.load %arg4[%c0_9, %c0_10] : memref<8x128xf32, #tpu.memory_space<vmem>>, vector<8x128xf32>
      tpu.vector_store %arg4[%c0_9, %c0_10], %12 {strides = array<i32>} : memref<8x128xf32, #tpu.memory_space<vmem>>, vector<8x128xf32>,
    } else {
    }
    %c0 = arith.constant 0 : index
    %c0_1 = arith.constant 0 : index
    %3 = vector.load %arg2[%c0, %c0_1] : memref<16x128xf32, #tpu.memory_space<vmem>>, vector<16x128xf32>
    %c0_2 = arith.constant 0 : index
    %c0_3 = arith.constant 0 : index
    %4 = vector.load %arg4[%c0_2, %c0_3] : memref<8x128xf32, #tpu.memory_space<vmem>>, vector<8x128xf32>
    %5 = vector.shape_cast %3 : vector<16x128xf32> to vector<2x8x128xf32>
    %cst = arith.constant dense<0.000000e+00> : vector<8x128xf32>
    %6 = vector.multi_reduction <add>, %5, %cst [0] : vector<2x8x128xf32> to vector<8x128xf32>
    %7 = arith.addf %4, %6 : vector<8x128xf32>
    %c0_4 = arith.constant 0 : index
    %c0_5 = arith.constant 0 : index
    %8 = vector.load %arg4[%c0_4, %c0_5] : memref<8x128xf32, #tpu.memory_space<vmem>>, vector<8x128xf32>
    tpu.vector_store %arg4[%c0_4, %c0_5], %7 {strides = array<i32>} : memref<8x128xf32, #tpu.memory_space<vmem>>, vector<8x128xf32>,
    %c0_i32_6 = arith.constant 0 : i32
    %9 = arith.cmpi eq, %arg1, %c0_i32_6 : i32
    %10 = arith.extui %9 : i1 to i32
    %c0_i32_7 = arith.constant 0 : i32
    %11 = arith.cmpi ne, %10, %c0_i32_7 : i32
    scf.if %11 {
      %c0_8 = arith.constant 0 : index
      %c0_9 = arith.constant 0 : index
      %12 = vector.load %arg4[%c0_8, %c0_9] : memref<8x128xf32, #tpu.memory_space<vmem>>, vector<8x128xf32>
      %c0_10 = arith.constant 0 : index
      %c0_11 = arith.constant 0 : index
      %13 = vector.load %arg3[%c0_10, %c0_11] : memref<8x128xf32, #tpu.memory_space<vmem>>, vector<8x128xf32>
      tpu.vector_store %arg3[%c0_10, %c0_11], %12 {strides = array<i32>} : memref<8x128xf32, #tpu.memory_space<vmem>>, vector<8x128xf32>,
    } else {
    }
    return
  }
  func.func @transform_0(%arg0: i32, %arg1: i32) -> (i32, i32) {
    %c1_i32 = arith.constant 1 : i32
    %0 = arith.muli %arg0, %c1_i32 : i32
    %1 = arith.addi %0, %arg1 : i32
    %c0_i32 = arith.constant 0 : i32
    %c0_i32_0 = arith.constant 0 : i32
    return %1, %c0_i32 : i32, i32
  }
  func.func @transform_1(%arg0: i32, %arg1: i32) -> (i32, i32) {
    %c0_i32 = arith.constant 0 : i32
    %c0_i32_0 = arith.constant 0 : i32
    return %arg0, %c0_i32 : i32, i32
  }
}

</mosaic_0001>

<llo_original>
// kernel: tpu_custom_call.1
$region0: #{tpu_custom_call.1}
  #allocation0 [shape = 'u32[]', space=smem, size = 0x4, offset = 0x4, fixed_abs, tag = 'smem constant byte address 0x4 - core index']
  #allocation1 [shape = 'u32[144,128]{1,0:T(1,128)}', space=vmem, size = 0x12000, scoped, tag = 'internal scratch']
  #allocation2 [shape = 'f32[8,128]{1,0:T(8,128)}', space=vmem, size = 0x1000, scoped, tag = 'scratch operand']
  %s0 = inlined_call_operand.hbm [shape: f32[16,128], index: 0, kind: input, shape index: {}]
  %s1 = inlined_call_operand.hbm [shape: f32[8,128], index: 1, kind: output, shape index: {}]
  %s2 = sld [smem:[#allocation0]]
  $region26: #{tpu_custom_call.1} parent=0
    _
  %s4 = ssub.s32 1, %s2
  %s5 = scalar_select 0, %s4, %s2
  $region1: #{tpu_custom_call.1} parent=0
    #allocation3 [shape = 'u8[8192]{0}', space=vmem, size = 0x2000, scoped, tag = 'input window, operand 0, single buffered']
    #allocation4 [shape = 's32[1]{0}', space=sflag, size = 0x4, scoped, tag = 'scoped memory for tpu_custom_call.1']
    #allocation5 [shape = 's32[1]{0}', space=sflag, size = 0x4, scoped, tag = 'scoped memory for tpu_custom_call.1']
    #allocation6 [shape = 'u8[4096]{0}', space=vmem, size = 0x1000, scoped, tag = 'output window, operand 0, single buffered']
    %6 = vsyncpa [#allocation4], 0
    %7 = vsyncpa [#allocation5], 0
    // Predicated region
    $region2: #{tpu_custom_call.1} parent=1 // pred_check
      _
    $region3: #{tpu_custom_call.1} parent=1 // pred_check_branch
      %9 = sbr.rel (0) target = $region5
    $region4: #{tpu_custom_call.1} parent=1 // pred_region
      %s10 = sadd.s32 0, 0
      %s11 = smul.u32 2, %s10
      %s13 = ssub.s32 256, 256
      %14 = vsyncadd [#allocation4], %s13
      %s15 = smul.addr %s11, 128
      %s16 = scalar_lea.hbm %s0, %s15
      %s17 = sshll.u32 [#allocation3], 4
      %s18 = int_to_ptr.vmem [resolvable:$true] %s17
      %23 = dma.hbm_to_vmem [thread:$0]  %s16, 256, %s18, [#allocation4], 128, 128, 8
    $region5: #{tpu_custom_call.1} parent=1 // pred_fallthru
      _
    // Predicated region
    $region6: #{tpu_custom_call.1} parent=1 // pred_check
      _
    $region7: #{tpu_custom_call.1} parent=1 // pred_check_branch
      %25 = sbr.rel (0) target = $region9
    $region8: #{tpu_custom_call.1} parent=1 // pred_region
      %26 = dma.done [#allocation4], 256
    $region9: #{tpu_custom_call.1} parent=1 // pred_fallthru
      _
    %s27 = sadd.s32 0, 0
    %s28 = smul.u32 2, %s27
    %p29 = scmp.eq.s32.totalorder 0, 0
    // Predicated region
    $region10: #{tpu_custom_call.1} parent=1 // pred_check
      %p30 = pneg %p29
    $region11: #{tpu_custom_call.1} parent=1 // pred_check_branch
      %32 = sbr.rel (%p30) target = $region13
    $region12: #{tpu_custom_call.1} parent=1 // pred_region
      %33 = vst [vmem:[#allocation2] sm:$0xff] 0.0
    $region13: #{tpu_custom_call.1} parent=1 // pred_fallthru
      _
    %v34 = vld [vmem:[#allocation3] sm:$0xff]
    %v35 = vld [vmem:[#allocation3 + $0x8] sm:$0xff]
    %v36 = vld [vmem:[#allocation2] sm:$0xff]
    %v37 = vadd.f32 %v34, %v35
    %v38 = vadd.f32 %v36, %v37
    %39 = vst [vmem:[#allocation2] sm:$0xff] %v38
    // Predicated region
    $region14: #{tpu_custom_call.1} parent=1 // pred_check
      %p40 = pneg %p29
    $region15: #{tpu_custom_call.1} parent=1 // pred_check_branch
      %42 = sbr.rel (%p40) target = $region17
    $region16: #{tpu_custom_call.1} parent=1 // pred_region
      %v43 = vld [vmem:[#allocation2] sm:$0xff]
      %44 = vst [vmem:[#allocation6] sm:$0xff] %v43
    $region17: #{tpu_custom_call.1} parent=1 // pred_fallthru
      _
    // Predicated region
    $region18: #{tpu_custom_call.1} parent=1 // pred_check
      _
    $region19: #{tpu_custom_call.1} parent=1 // pred_check_branch
      %46 = sbr.rel (0) target = $region21
    $region20: #{tpu_custom_call.1} parent=1 // pred_region
      %s48 = ssub.s32 128, 128
      %49 = vsyncadd [#allocation5], %s48
      %s51 = sshll.u32 [#allocation6], 4
      %s52 = int_to_ptr.vmem [resolvable:$true] %s51
      %54 = dma.vmem_to_hbm [thread:$0]  %s52, 128, %s1, [#allocation5]
    $region21: #{tpu_custom_call.1} parent=1 // pred_fallthru
      _
    // Predicated region
    $region22: #{tpu_custom_call.1} parent=1 // pred_check
      _
    $region23: #{tpu_custom_call.1} parent=1 // pred_check_branch
      %56 = sbr.rel (0) target = $region25
    $region24: #{tpu_custom_call.1} parent=1 // pred_region
      %57 = dma.done [#allocation5], 128
    $region25: #{tpu_custom_call.1} parent=1 // pred_fallthru
      _
    %58 = vsyncpa [#allocation4], 1
    %59 = vsyncpa [#allocation5], 1

</llo_original>
